<compile_context>
chip_gen: v6e
topology: v6e:2x2x1
jax: 0.10.0
libtpu: 0.0.40
codegen_flags: <defaults>
</compile_context>

<pallas_src>
import math
import functools

import jax
import jax.numpy as jnp
from jax.experimental import pallas as pl
from jax.experimental.pallas import tpu as pltpu

# ---- module-level constants reproduced from the PyTorch file ----
expand_factor = 2
model_scale = 1.0
num_blocks = round(8 * math.log2(1.0 + model_scale))                 # 8
qk_dim_div = 8
to_nearest_64 = lambda x: round(x / 64) * 64
residual_depth = to_nearest_64(384 * math.log2(1.0 + model_scale))   # 384

_SQRT_2_OVER_PI = 0.7978845608028654


def _gelu(x):
    # tanh-approximation GELU: the transcendental goes to the EUP slot instead of a
    # ~12-op VPU polynomial.  Max abs deviation from the exact erf-GELU is ~3e-4.
    return 0.5 * x * (1.0 + jnp.tanh(_SQRT_2_OVER_PI * (x + 0.044715 * x * x * x)))


def _block_kernel(scale,
                  q_ref, kv_ref, gamma_ref, beta_ref,
                  wq_ref, wkv_ref, p_loc_ref, p_att_ref,
                  o_ref,
                  m_s, l_s, acc_s, q_s, gl_s):
    f32 = jnp.float32
    bf16 = jnp.bfloat16
    ki = pl.program_id(2)
    qk_pad = q_s.shape[-1]
    v_dim = acc_s.shape[-1]
    local_dim = gl_s.shape[-1]

    # ---- query-side work: done once per (batch, q-tile), at the first kv step ----
    @pl.when(ki == 0)
    def _init():
        x = q_ref[0]                                           # (TQ, D) f32 residual stream
        mean = jnp.mean(x, axis=-1, keepdims=True)
        var = jnp.mean((x - mean) ** 2, axis=-1, keepdims=True)
        xn = (x - mean) * jax.lax.rsqrt(var + 1e-5) * gamma_ref[...] + beta_ref[...]

        # Fused, lane-dense projection: (TQ, qk_pad + 2*local) in a single MXU pass.
        proj = jnp.dot(xn.astype(bf16), wq_ref[...], preferred_element_type=f32)
        q_s[...] = proj[:, :qk_pad] * scale                    # fold 1/sqrt(qk) into query
        lin_local = proj[:, qk_pad:qk_pad + local_dim]
        pre_geglu_local = proj[:, qk_pad + local_dim:]
        gl_s[...] = lin_local * _gelu(pre_geglu_local)

        m_s[...] = jnp.full_like(m_s, -jnp.inf)
        l_s[...] = jnp.zeros_like(l_s)
        acc_s[...] = jnp.zeros_like(acc_s)

    # ---- streamed kv tile: fused projection + online-softmax update ----
    kvt = kv_ref[0].astype(bf16)                               # (TK, D)
    kproj = jnp.dot(kvt, wkv_ref[...], preferred_element_type=f32)  # (TK, qk_pad + 2*v)
    key = kproj[:, :qk_pad]
    lin_value = kproj[:, qk_pad:qk_pad + v_dim]
    pre_geglu_value = kproj[:, qk_pad + v_dim:]
    geglu_value = lin_value * _gelu(pre_geglu_value)

    # scores without an explicit key transpose: contract last dims directly on the MXU.
    s = jax.lax.dot_general(q_s[...].astype(bf16), key.astype(bf16),
                            dimension_numbers=(((1,), (1,)), ((), ())),
                            preferred_element_type=f32)        # (TQ, TK)

    m_prev = m_s[...]
    m_new = jnp.maximum(m_prev, jnp.max(s, axis=-1, keepdims=True))
    alpha = jnp.exp(m_prev - m_new)
    p = jnp.exp(s - m_new)
    l_s[...] = alpha * l_s[...] + jnp.sum(p, axis=-1, keepdims=True)
    acc_s[...] = alpha * acc_s[...] + jnp.dot(
        p.astype(bf16), geglu_value.astype(bf16), preferred_element_type=f32)
    m_s[...] = m_new

    # ---- finalize: normalize, output projection, residual add ----
    @pl.when(ki == pl.num_programs(2) - 1)
    def _finalize():
        attention = acc_s[...] * pl.reciprocal(l_s[...], approx=True)
        # out = cat([geglu_local, attention]) @ project.T, split into two dense matmuls.
        out = (jnp.dot(gl_s[...].astype(bf16), p_loc_ref[...], preferred_element_type=f32)
               + jnp.dot(attention.astype(bf16), p_att_ref[...], preferred_element_type=f32))
        o_ref[0] = q_ref[0] + out


def prepare_block_weights(params):
    """One-time weight preprocessing (transpose / fuse / qk zero-pad / bf16 cast)."""
    Wq = params["Wq"]            # (qk + 2*local, D)
    Wkv = params["Wkv"]          # (qk + 2*v, D)
    P = params["project"]        # (D, expand_dim)
    D = Wq.shape[1]
    qk = D // qk_dim_div
    v = D
    local = D * expand_factor - v
    qk_pad = ((qk + 127) // 128) * 128   # lane-align the qk slice; zero cols -> scores unchanged

    WqT = Wq.T                   # (D, qk + 2*local)
    wq = jnp.concatenate(
        [jnp.pad(WqT[:, :qk], ((0, 0), (0, qk_pad - qk))), WqT[:, qk:]],
        axis=1).astype(jnp.bfloat16)                           # (D, qk_pad + 2*local)

    WkvT = Wkv.T                 # (D, qk + 2*v)
    wkv = jnp.concatenate(
        [jnp.pad(WkvT[:, :qk], ((0, 0), (0, qk_pad - qk))), WkvT[:, qk:]],
        axis=1).astype(jnp.bfloat16)                           # (D, qk_pad + 2*v)

    PT = P.T                     # (expand_dim, D)
    p_loc = PT[:local].astype(jnp.bfloat16)                    # (local, D)
    p_att = PT[local:].astype(jnp.bfloat16)                    # (v, D)

    gamma = params["ln_gamma"].reshape(1, D).astype(jnp.float32)
    beta = params["ln_beta"].reshape(1, D).astype(jnp.float32)
    return {"wq": wq, "wkv": wkv, "p_loc": p_loc, "p_att": p_att,
            "gamma": gamma, "beta": beta}


def latent_cross_attention_block(q, kv, prep, *, tq=256, tk=256, vmem_limit_bytes=None):
    B, Lq, D = q.shape
    Bk, Lkv, Dk = kv.shape
    assert B == Bk and D == Dk
    qk_dim = D // qk_dim_div
    v_dim = D
    local_dim = D * expand_factor - v_dim
    qk_pad = prep["wq"].shape[1] - 2 * local_dim

    TQ = min(tq, Lq)
    TK = min(tk, Lkv)
    assert Lq % TQ == 0 and Lkv % TK == 0, "sequence lengths must divide the tile sizes"
    assert (TQ % 8 == 0 or TQ == Lq) and (TK % 8 == 0 or TK == Lkv)

    grid = (B, Lq // TQ, Lkv // TK)
    scale = 1.0 / math.sqrt(qk_dim)          # true qk_dim (zero-padded cols contribute 0)
    kernel = functools.partial(_block_kernel, scale)

    const = lambda b, qi, ki: (0, 0)         # weights: constant block -> Pallas skips re-DMA

    return pl.pallas_call(
        kernel,
        out_shape=jax.ShapeDtypeStruct((B, Lq, D), q.dtype),
        grid_spec=pltpu.PrefetchScalarGridSpec(
            num_scalar_prefetch=0,
            grid=grid,
            in_specs=[
                pl.BlockSpec((1, TQ, D), lambda b, qi, ki: (b, qi, 0)),   # q (residual)
                pl.BlockSpec((1, TK, D), lambda b, qi, ki: (b, ki, 0)),   # kv stream
                pl.BlockSpec((1, D), const),                              # ln gamma
                pl.BlockSpec((1, D), const),                              # ln beta
                pl.BlockSpec((D, qk_pad + 2 * local_dim), const),         # fused Wq^T (bf16)
                pl.BlockSpec((D, qk_pad + 2 * v_dim), const),             # fused Wkv^T (bf16)
                pl.BlockSpec((local_dim, D), const),                      # project^T[:local]
                pl.BlockSpec((v_dim, D), const),                          # project^T[local:]
            ],
            out_specs=pl.BlockSpec((1, TQ, D), lambda b, qi, ki: (b, qi, 0)),
            scratch_shapes=[
                pltpu.VMEM((TQ, 1), jnp.float32),          # running max
                pltpu.VMEM((TQ, 1), jnp.float32),          # running sum
                pltpu.VMEM((TQ, v_dim), jnp.float32),      # attention accumulator
                pltpu.VMEM((TQ, qk_pad), jnp.float32),     # pre-scaled query
                pltpu.VMEM((TQ, local_dim), jnp.float32),  # geglu_local
            ],
        ),
        compiler_params=pltpu.CompilerParams(
            dimension_semantics=("parallel", "parallel", "arbitrary"),
            vmem_limit_bytes=vmem_limit_bytes,
        ),
    )(q, kv, prep["gamma"], prep["beta"], prep["wq"], prep["wkv"],
      prep["p_loc"], prep["p_att"])


def init_params(key, num_dim):
    qk_dim = num_dim // qk_dim_div
    v_dim = num_dim
    expand_dim = num_dim * expand_factor
    local_dim = expand_dim - v_dim
    k1, k2, k3 = jax.random.split(key, 3)
    w_scale = 0.5 * (1.0 / residual_depth ** 0.5) * (1.0 / expand_factor)
    p_scale = 1.0 * (1.0 / residual_depth ** 0.5) * (1.0 / expand_factor) * (1.0 / num_blocks)
    return {
        "Wq": w_scale * jax.random.normal(k1, (qk_dim + 2 * local_dim, num_dim), jnp.float32),
        "Wkv": w_scale * jax.random.normal(k2, (qk_dim + 2 * v_dim, num_dim), jnp.float32),
        "project": p_scale * jax.random.normal(k3, (num_dim, expand_dim), jnp.float32),
        "ln_gamma": jnp.ones((num_dim,), jnp.float32),
        "ln_beta": jnp.zeros((num_dim,), jnp.float32),
    }


def reference_block(q, kv, params):
    """Pure-JAX f32 reference mirroring the PyTorch forward (exact erf-GELU)."""
    D = q.shape[-1]
    qk = D // qk_dim_div
    v = D
    local = D * expand_factor - v
    mean = jnp.mean(q, axis=-1, keepdims=True)
    var = jnp.mean((q - mean) ** 2, axis=-1, keepdims=True)
    xn = (q - mean) * jax.lax.rsqrt(var + 1e-5) * params["ln_gamma"] + params["ln_beta"]
    proj = xn @ params["Wq"].T
    query, lin_local, pre_l = jnp.split(proj, [qk, qk + local], axis=-1)
    geglu_local = lin_local * jax.nn.gelu(pre_l, approximate=False)
    kproj = kv @ params["Wkv"].T
    key, lin_value, pre_v = jnp.split(kproj, [qk, qk + v], axis=-1)
    geglu_value = lin_value * jax.nn.gelu(pre_v, approximate=False)
    scores = jnp.einsum("bqd,bkd->bqk", query, key) / math.sqrt(qk)
    probs = jax.nn.softmax(scores, axis=-1)
    attention = jnp.einsum("bqk,bkd->bqd", probs, geglu_value)
    out = jnp.concatenate([geglu_local, attention], axis=-1) @ params["project"].T
    return q + out


if __name__ == "__main__":
    # Small shapes; tile sizes chosen so both the q-tile and kv-tile grid axes have
    # more than one step (exercises the streamed online-softmax path).
    B, Lq, Lkv, D = 2, 16, 16, 64   # D divisible by qk_dim_div=8 -> qk_dim=8
    root = jax.random.PRNGKey(0)
    kq, kkv, kparams = jax.random.split(root, 3)
    q = jax.random.normal(kq, (B, Lq, D), jnp.float32)
    kv = jax.random.normal(kkv, (B, Lkv, D), jnp.float32)
    params = init_params(kparams, D)
    prep = prepare_block_weights(params)   # one-time weight prep (not per forward call)

    out = latent_cross_attention_block(q, kv, prep, tq=8, tk=8)
    jax.block_until_ready(out)
    assert out.shape == (B, Lq, D) and out.dtype == jnp.float32

    ref = reference_block(q, kv, params)
    max_err = float(jnp.max(jnp.abs(out - ref)))
    assert max_err < 2e-2, f"mismatch vs reference: max abs err {max_err}"
    print("KERNEL_OK")
</pallas_src>

<mosaic_0001>
module attributes {stable_mosaic.version = 11 : i64} {
  func.func @_block_kernel(%arg0: i32, %arg1: i32, %arg2: i32, %arg3: memref<1x8x64xf32, #tpu.memory_space<vmem>>, %arg4: memref<1x8x64xf32, #tpu.memory_space<vmem>>, %arg5: memref<1x64xf32, #tpu.memory_space<vmem>>, %arg6: memref<1x64xf32, #tpu.memory_space<vmem>>, %arg7: memref<64x256xbf16, #tpu.memory_space<vmem>>, %arg8: memref<64x256xbf16, #tpu.memory_space<vmem>>, %arg9: memref<64x64xbf16, #tpu.memory_space<vmem>>, %arg10: memref<64x64xbf16, #tpu.memory_space<vmem>>, %arg11: memref<1x8x64xf32, #tpu.memory_space<vmem>>, %arg12: memref<8x1xf32, #tpu.memory_space<vmem>>, %arg13: memref<8x1xf32, #tpu.memory_space<vmem>>, %arg14: memref<8x64xf32, #tpu.memory_space<vmem>>, %arg15: memref<8x128xf32, #tpu.memory_space<vmem>>, %arg16: memref<8x64xf32, #tpu.memory_space<vmem>>) attributes {dimension_semantics = [#tpu.dimension_semantics<parallel>, #tpu.dimension_semantics<parallel>, #tpu.dimension_semantics<arbitrary>], iteration_bounds = array<i64: 2, 2, 2>, scalar_prefetch = 0 : i64, scratch_operands = 5 : i64, tpu.core_type = #tpu.core_type<tc>, window_params = [{transform_indices = @transform_0, window_bounds = array<i64: 1, 8, 64>}, {transform_indices = @transform_1, window_bounds = array<i64: 1, 8, 64>}, {pipeline_mode = #tpu.pipeline_mode<synchronous>, transform_indices = @transform_2, window_bounds = array<i64: 1, 64>}, {pipeline_mode = #tpu.pipeline_mode<synchronous>, transform_indices = @transform_3, window_bounds = array<i64: 1, 64>}, {pipeline_mode = #tpu.pipeline_mode<synchronous>, transform_indices = @transform_4, window_bounds = array<i64: 64, 256>}, {pipeline_mode = #tpu.pipeline_mode<synchronous>, transform_indices = @transform_5, window_bounds = array<i64: 64, 256>}, {pipeline_mode = #tpu.pipeline_mode<synchronous>, transform_indices = @transform_6, window_bounds = array<i64: 64, 64>}, {pipeline_mode = #tpu.pipeline_mode<synchronous>, transform_indices = @transform_7, window_bounds = array<i64: 64, 64>}, {transform_indices = @transform_8, window_bounds = array<i64: 1, 8, 64>}]} {
    %c0_i32 = arith.constant 0 : i32
    %0 = arith.cmpi eq, %arg2, %c0_i32 : i32
    %1 = arith.extui %0 : i1 to i32
    %c0_i32_0 = arith.constant 0 : i32
    %2 = arith.cmpi ne, %1, %c0_i32_0 : i32
    scf.if %2 {
      %c0_28 = arith.constant 0 : index
      %c0_29 = arith.constant 0 : index
      %c0_30 = arith.constant 0 : index
      %56 = vector.load %arg3[%c0_28, %c0_29, %c0_30] : memref<1x8x64xf32, #tpu.memory_space<vmem>>, vector<1x8x64xf32>
      %57 = vector.shape_cast %56 : vector<1x8x64xf32> to vector<8x64xf32>
      %cst_31 = arith.constant dense<0.000000e+00> : vector<8xf32>
      %58 = vector.multi_reduction <add>, %57, %cst_31 [1] : vector<8x64xf32> to vector<8xf32>
      %59 = vector.shape_cast %58 : vector<8xf32> to vector<8x1xf32>
      %cst_32 = arith.constant 6.400000e+01 : f32
      %60 = vector.broadcast %cst_32 : f32 to vector<8x1xf32>
      %61 = arith.divf %59, %60 : vector<8x1xf32>
      %62 = vector.broadcast %61 : vector<8x1xf32> to vector<8x64xf32>
      %63 = arith.subf %57, %62 : vector<8x64xf32>
      %64 = arith.mulf %63, %63 : vector<8x64xf32>
      %cst_33 = arith.constant dense<0.000000e+00> : vector<8xf32>
      %65 = vector.multi_reduction <add>, %64, %cst_33 [1] : vector<8x64xf32> to vector<8xf32>
      %66 = vector.shape_cast %65 : vector<8xf32> to vector<8x1xf32>
      %cst_34 = arith.constant 6.400000e+01 : f32
      %67 = vector.broadcast %cst_34 : f32 to vector<8x1xf32>
      %68 = arith.divf %66, %67 : vector<8x1xf32>
      %69 = vector.broadcast %61 : vector<8x1xf32> to vector<8x64xf32>
      %70 = arith.subf %57, %69 : vector<8x64xf32>
      %cst_35 = arith.constant 9.99999974E-6 : f32
      %71 = vector.broadcast %cst_35 : f32 to vector<8x1xf32>
      %72 = arith.addf %68, %71 : vector<8x1xf32>
      %73 = math.rsqrt %72 : vector<8x1xf32>
      %74 = vector.broadcast %73 : vector<8x1xf32> to vector<8x64xf32>
      %75 = arith.mulf %70, %74 : vector<8x64xf32>
      %c0_36 = arith.constant 0 : index
      %c0_37 = arith.constant 0 : index
      %76 = vector.load %arg5[%c0_36, %c0_37] : memref<1x64xf32, #tpu.memory_space<vmem>>, vector<1x64xf32>
      %77 = vector.broadcast %76 : vector<1x64xf32> to vector<8x64xf32>
      %78 = arith.mulf %75, %77 : vector<8x64xf32>
      %c0_38 = arith.constant 0 : index
      %c0_39 = arith.constant 0 : index
      %79 = vector.load %arg6[%c0_38, %c0_39] : memref<1x64xf32, #tpu.memory_space<vmem>>, vector<1x64xf32>
      %80 = vector.broadcast %79 : vector<1x64xf32> to vector<8x64xf32>
      %81 = arith.addf %78, %80 : vector<8x64xf32>
      %82 = arith.truncf %81 : vector<8x64xf32> to vector<8x64xbf16>
      %c0_40 = arith.constant 0 : index
      %c0_41 = arith.constant 0 : index
      %83 = vector.load %arg7[%c0_40, %c0_41] : memref<64x256xbf16, #tpu.memory_space<vmem>>, vector<64x256xbf16>
      %cst_42 = arith.constant dense<0.000000e+00> : vector<8x256xf32>
      %84 = tpu.matmul %82, %83, %cst_42 {dimension_numbers = #tpu.dot_dimension_numbers<[1], [0], [0], [1], [0, 0, 1, 1], [], []>} : vector<8x64xbf16>, vector<64x256xbf16>, vector<8x256xf32> -> vector<8x256xf32>
      %85 = vector.extract_strided_slice %84 {offsets = [0, 0], sizes = [8, 128], strides = [1, 1]} : vector<8x256xf32> to vector<8x128xf32>
      %cst_43 = arith.constant 0.353553385 : f32
      %86 = vector.broadcast %cst_43 : f32 to vector<8x128xf32>
      %87 = arith.mulf %85, %86 : vector<8x128xf32>
      %c0_44 = arith.constant 0 : index
      %c0_45 = arith.constant 0 : index
      %88 = vector.load %arg15[%c0_44, %c0_45] : memref<8x128xf32, #tpu.memory_space<vmem>>, vector<8x128xf32>
      tpu.vector_store %arg15[%c0_44, %c0_45], %87 {strides = array<i32>} : memref<8x128xf32, #tpu.memory_space<vmem>>, vector<8x128xf32>,
      %89 = vector.extract_strided_slice %84 {offsets = [0, 128], sizes = [8, 64], strides = [1, 1]} : vector<8x256xf32> to vector<8x64xf32>
      %90 = vector.extract_strided_slice %84 {offsets = [0, 192], sizes = [8, 64], strides = [1, 1]} : vector<8x256xf32> to vector<8x64xf32>
      %cst_46 = arith.constant 5.000000e-01 : f32
      %91 = vector.broadcast %cst_46 : f32 to vector<8x64xf32>
      %92 = arith.mulf %91, %90 : vector<8x64xf32>
      %cst_47 = arith.constant 4.471500e-02 : f32
      %93 = vector.broadcast %cst_47 : f32 to vector<8x64xf32>
      %94 = arith.mulf %93, %90 : vector<8x64xf32>
      %95 = arith.mulf %94, %90 : vector<8x64xf32>
      %96 = arith.mulf %95, %90 : vector<8x64xf32>
      %97 = arith.addf %90, %96 : vector<8x64xf32>
      %cst_48 = arith.constant 0.797884583 : f32
      %98 = vector.broadcast %cst_48 : f32 to vector<8x64xf32>
      %99 = arith.mulf %98, %97 : vector<8x64xf32>
      %100 = math.tanh %99 : vector<8x64xf32>
      %cst_49 = arith.constant 1.000000e+00 : f32
      %101 = vector.broadcast %cst_49 : f32 to vector<8x64xf32>
      %102 = arith.addf %101, %100 : vector<8x64xf32>
      %103 = arith.mulf %92, %102 : vector<8x64xf32>
      %104 = arith.mulf %89, %103 : vector<8x64xf32>
      %c0_50 = arith.constant 0 : index
      %c0_51 = arith.constant 0 : index
      %105 = vector.load %arg16[%c0_50, %c0_51] : memref<8x64xf32, #tpu.memory_space<vmem>>, vector<8x64xf32>
      tpu.vector_store %arg16[%c0_50, %c0_51], %104 {strides = array<i32>} : memref<8x64xf32, #tpu.memory_space<vmem>>, vector<8x64xf32>,
      %cst_52 = arith.constant 0xFF800000 : f32
      %106 = vector.broadcast %cst_52 : f32 to vector<8x1xf32>
      %c0_53 = arith.constant 0 : index
      %c0_54 = arith.constant 0 : index
      %107 = vector.load %arg12[%c0_53, %c0_54] : memref<8x1xf32, #tpu.memory_space<vmem>>, vector<8x1xf32>
      tpu.vector_store %arg12[%c0_53, %c0_54], %106 {strides = array<i32>} : memref<8x1xf32, #tpu.memory_space<vmem>>, vector<8x1xf32>,
      %cst_55 = arith.constant 0.000000e+00 : f32
      %108 = vector.broadcast %cst_55 : f32 to vector<8x1xf32>
      %c0_56 = arith.constant 0 : index
      %c0_57 = arith.constant 0 : index
      %109 = vector.load %arg13[%c0_56, %c0_57] : memref<8x1xf32, #tpu.memory_space<vmem>>, vector<8x1xf32>
      tpu.vector_store %arg13[%c0_56, %c0_57], %108 {strides = array<i32>} : memref<8x1xf32, #tpu.memory_space<vmem>>, vector<8x1xf32>,
      %cst_58 = arith.constant 0.000000e+00 : f32
      %110 = vector.broadcast %cst_58 : f32 to vector<8x64xf32>
      %c0_59 = arith.constant 0 : index
      %c0_60 = arith.constant 0 : index
      %111 = vector.load %arg14[%c0_59, %c0_60] : memref<8x64xf32, #tpu.memory_space<vmem>>, vector<8x64xf32>
      tpu.vector_store %arg14[%c0_59, %c0_60], %110 {strides = array<i32>} : memref<8x64xf32, #tpu.memory_space<vmem>>, vector<8x64xf32>,
    } else {
    }
    %c0 = arith.constant 0 : index
    %c0_1 = arith.constant 0 : index
    %c0_2 = arith.constant 0 : index
    %3 = vector.load %arg4[%c0, %c0_1, %c0_2] : memref<1x8x64xf32, #tpu.memory_space<vmem>>, vector<1x8x64xf32>
    %4 = vector.shape_cast %3 : vector<1x8x64xf32> to vector<8x64xf32>
    %5 = arith.truncf %4 : vector<8x64xf32> to vector<8x64xbf16>
    %c0_3 = arith.constant 0 : index
    %c0_4 = arith.constant 0 : index
    %6 = vector.load %arg8[%c0_3, %c0_4] : memref<64x256xbf16, #tpu.memory_space<vmem>>, vector<64x256xbf16>
    %cst = arith.constant dense<0.000000e+00> : vector<8x256xf32>
    %7 = tpu.matmul %5, %6, %cst {dimension_numbers = #tpu.dot_dimension_numbers<[1], [0], [0], [1], [0, 0, 1, 1], [], []>} : vector<8x64xbf16>, vector<64x256xbf16>, vector<8x256xf32> -> vector<8x256xf32>
    %8 = vector.extract_strided_slice %7 {offsets = [0, 0], sizes = [8, 128], strides = [1, 1]} : vector<8x256xf32> to vector<8x128xf32>
    %9 = vector.extract_strided_slice %7 {offsets = [0, 128], sizes = [8, 64], strides = [1, 1]} : vector<8x256xf32> to vector<8x64xf32>
    %10 = vector.extract_strided_slice %7 {offsets = [0, 192], sizes = [8, 64], strides = [1, 1]} : vector<8x256xf32> to vector<8x64xf32>
    %cst_5 = arith.constant 5.000000e-01 : f32
    %11 = vector.broadcast %cst_5 : f32 to vector<8x64xf32>
    %12 = arith.mulf %11, %10 : vector<8x64xf32>
    %cst_6 = arith.constant 4.471500e-02 : f32
    %13 = vector.broadcast %cst_6 : f32 to vector<8x64xf32>
    %14 = arith.mulf %13, %10 : vector<8x64xf32>
    %15 = arith.mulf %14, %10 : vector<8x64xf32>
    %16 = arith.mulf %15, %10 : vector<8x64xf32>
    %17 = arith.addf %10, %16 : vector<8x64xf32>
    %cst_7 = arith.constant 0.797884583 : f32
    %18 = vector.broadcast %cst_7 : f32 to vector<8x64xf32>
    %19 = arith.mulf %18, %17 : vector<8x64xf32>
    %20 = math.tanh %19 : vector<8x64xf32>
    %cst_8 = arith.constant 1.000000e+00 : f32
    %21 = vector.broadcast %cst_8 : f32 to vector<8x64xf32>
    %22 = arith.addf %21, %20 : vector<8x64xf32>
    %23 = arith.mulf %12, %22 : vector<8x64xf32>
    %24 = arith.mulf %9, %23 : vector<8x64xf32>
    %c0_9 = arith.constant 0 : index
    %c0_10 = arith.constant 0 : index
    %25 = vector.load %arg15[%c0_9, %c0_10] : memref<8x128xf32, #tpu.memory_space<vmem>>, vector<8x128xf32>
    %26 = arith.truncf %25 : vector<8x128xf32> to vector<8x128xbf16>
    %27 = arith.truncf %8 : vector<8x128xf32> to vector<8x128xbf16>
    %cst_11 = arith.constant dense<0.000000e+00> : vector<8x8xf32>
    %28 = tpu.matmul %26, %27, %cst_11 {dimension_numbers = #tpu.dot_dimension_numbers<[1], [1], [0], [0], [0, 0, 1, 0], [], []>} : vector<8x128xbf16>, vector<8x128xbf16>, vector<8x8xf32> -> vector<8x8xf32>
    %c0_12 = arith.constant 0 : index
    %c0_13 = arith.constant 0 : index
    %29 = vector.load %arg12[%c0_12, %c0_13] : memref<8x1xf32, #tpu.memory_space<vmem>>, vector<8x1xf32>
    %cst_14 = arith.constant dense<0xFF800000> : vector<8xf32>
    %30 = vector.multi_reduction <maximumf>, %28, %cst_14 [1] : vector<8x8xf32> to vector<8xf32>
    %31 = vector.shape_cast %30 : vector<8xf32> to vector<8x1xf32>
    %32 = arith.maximumf %29, %31 : vector<8x1xf32>
    %33 = arith.subf %29, %32 : vector<8x1xf32>
    %34 = math.exp %33 : vector<8x1xf32>
    %35 = vector.broadcast %32 : vector<8x1xf32> to vector<8x8xf32>
    %36 = arith.subf %28, %35 : vector<8x8xf32>
    %37 = math.exp %36 : vector<8x8xf32>
    %c0_15 = arith.constant 0 : index
    %c0_16 = arith.constant 0 : index
    %38 = vector.load %arg13[%c0_15, %c0_16] : memref<8x1xf32, #tpu.memory_space<vmem>>, vector<8x1xf32>
    %39 = arith.mulf %34, %38 : vector<8x1xf32>
    %cst_17 = arith.constant dense<0.000000e+00> : vector<8xf32>
    %40 = vector.multi_reduction <add>, %37, %cst_17 [1] : vector<8x8xf32> to vector<8xf32>
    %41 = vector.shape_cast %40 : vector<8xf32> to vector<8x1xf32>
    %42 = arith.addf %39, %41 : vector<8x1xf32>
    %c0_18 = arith.constant 0 : index
    %c0_19 = arith.constant 0 : index
    %43 = vector.load %arg13[%c0_18, %c0_19] : memref<8x1xf32, #tpu.memory_space<vmem>>, vector<8x1xf32>
    tpu.vector_store %arg13[%c0_18, %c0_19], %42 {strides = array<i32>} : memref<8x1xf32, #tpu.memory_space<vmem>>, vector<8x1xf32>,
    %c0_20 = arith.constant 0 : index
    %c0_21 = arith.constant 0 : index
    %44 = vector.load %arg14[%c0_20, %c0_21] : memref<8x64xf32, #tpu.memory_space<vmem>>, vector<8x64xf32>
    %45 = vector.broadcast %34 : vector<8x1xf32> to vector<8x64xf32>
    %46 = arith.mulf %45, %44 : vector<8x64xf32>
    %47 = arith.truncf %37 : vector<8x8xf32> to vector<8x8xbf16>
    %48 = arith.truncf %24 : vector<8x64xf32> to vector<8x64xbf16>
    %cst_22 = arith.constant dense<0.000000e+00> : vector<8x64xf32>
    %49 = tpu.matmul %47, %48, %cst_22 {dimension_numbers = #tpu.dot_dimension_numbers<[1], [0], [0], [1], [0, 0, 1, 1], [], []>} : vector<8x8xbf16>, vector<8x64xbf16>, vector<8x64xf32> -> vector<8x64xf32>
    %50 = arith.addf %46, %49 : vector<8x64xf32>
    %c0_23 = arith.constant 0 : index
    %c0_24 = arith.constant 0 : index
    %51 = vector.load %arg14[%c0_23, %c0_24] : memref<8x64xf32, #tpu.memory_space<vmem>>, vector<8x64xf32>
    tpu.vector_store %arg14[%c0_23, %c0_24], %50 {strides = array<i32>} : memref<8x64xf32, #tpu.memory_space<vmem>>, vector<8x64xf32>,
    %c0_25 = arith.constant 0 : index
    %c0_26 = arith.constant 0 : index
    %52 = vector.load %arg12[%c0_25, %c0_26] : memref<8x1xf32, #tpu.memory_space<vmem>>, vector<8x1xf32>
    tpu.vector_store %arg12[%c0_25, %c0_26], %32 {strides = array<i32>} : memref<8x1xf32, #tpu.memory_space<vmem>>, vector<8x1xf32>,
    %c1_i32 = arith.constant 1 : i32
    %53 = arith.cmpi eq, %arg2, %c1_i32 : i32
    %54 = arith.extui %53 : i1 to i32
    %c0_i32_27 = arith.constant 0 : i32
    %55 = arith.cmpi ne, %54, %c0_i32_27 : i32
    scf.if %55 {
      %c0_28 = arith.constant 0 : index
      %c0_29 = arith.constant 0 : index
      %56 = vector.load %arg14[%c0_28, %c0_29] : memref<8x64xf32, #tpu.memory_space<vmem>>, vector<8x64xf32>
      %c0_30 = arith.constant 0 : index
      %c0_31 = arith.constant 0 : index
      %57 = vector.load %arg13[%c0_30, %c0_31] : memref<8x1xf32, #tpu.memory_space<vmem>>, vector<8x1xf32>
      %58 = tpu.reciprocal %57 {approx = true} : vector<8x1xf32> -> vector<8x1xf32>
      %59 = vector.broadcast %58 : vector<8x1xf32> to vector<8x64xf32>
      %60 = arith.mulf %56, %59 : vector<8x64xf32>
      %c0_32 = arith.constant 0 : index
      %c0_33 = arith.constant 0 : index
      %61 = vector.load %arg16[%c0_32, %c0_33] : memref<8x64xf32, #tpu.memory_space<vmem>>, vector<8x64xf32>
      %62 = arith.truncf %61 : vector<8x64xf32> to vector<8x64xbf16>
      %c0_34 = arith.constant 0 : index
      %c0_35 = arith.constant 0 : index
      %63 = vector.load %arg9[%c0_34, %c0_35] : memref<64x64xbf16, #tpu.memory_space<vmem>>, vector<64x64xbf16>
      %cst_36 = arith.constant dense<0.000000e+00> : vector<8x64xf32>
      %64 = tpu.matmul %62, %63, %cst_36 {dimension_numbers = #tpu.dot_dimension_numbers<[1], [0], [0], [1], [0, 0, 1, 1], [], []>} : vector<8x64xbf16>, vector<64x64xbf16>, vector<8x64xf32> -> vector<8x64xf32>
      %65 = arith.truncf %60 : vector<8x64xf32> to vector<8x64xbf16>
      %c0_37 = arith.constant 0 : index
      %c0_38 = arith.constant 0 : index
      %66 = vector.load %arg10[%c0_37, %c0_38] : memref<64x64xbf16, #tpu.memory_space<vmem>>, vector<64x64xbf16>
      %cst_39 = arith.constant dense<0.000000e+00> : vector<8x64xf32>
      %67 = tpu.matmul %65, %66, %cst_39 {dimension_numbers = #tpu.dot_dimension_numbers<[1], [0], [0], [1], [0, 0, 1, 1], [], []>} : vector<8x64xbf16>, vector<64x64xbf16>, vector<8x64xf32> -> vector<8x64xf32>
      %68 = arith.addf %64, %67 : vector<8x64xf32>
      %c0_40 = arith.constant 0 : index
      %c0_41 = arith.constant 0 : index
      %c0_42 = arith.constant 0 : index
      %69 = vector.load %arg3[%c0_40, %c0_41, %c0_42] : memref<1x8x64xf32, #tpu.memory_space<vmem>>, vector<1x8x64xf32>
      %70 = vector.shape_cast %69 : vector<1x8x64xf32> to vector<8x64xf32>
      %71 = arith.addf %70, %68 : vector<8x64xf32>
      %c0_43 = arith.constant 0 : index
      %c0_44 = arith.constant 0 : index
      %c0_45 = arith.constant 0 : index
      %72 = vector.load %arg11[%c0_43, %c0_44, %c0_45] : memref<1x8x64xf32, #tpu.memory_space<vmem>>, vector<1x8x64xf32>
      %73 = vector.shape_cast %72 : vector<1x8x64xf32> to vector<8x64xf32>
      %74 = vector.shape_cast %71 : vector<8x64xf32> to vector<1x8x64xf32>
      tpu.vector_store %arg11[%c0_43, %c0_44, %c0_45], %74 {strides = array<i32>} : memref<1x8x64xf32, #tpu.memory_space<vmem>>, vector<1x8x64xf32>,
    } else {
    }
    return
  }
  func.func @transform_0(%arg0: i32, %arg1: i32, %arg2: i32) -> (i32, i32, i32) {
    %c0_i32 = arith.constant 0 : i32
    %c0_i32_0 = arith.constant 0 : i32
    return %arg0, %arg1, %c0_i32 : i32, i32, i32
  }
  func.func @transform_1(%arg0: i32, %arg1: i32, %arg2: i32) -> (i32, i32, i32) {
    %c0_i32 = arith.constant 0 : i32
    %c0_i32_0 = arith.constant 0 : i32
    return %arg0, %arg2, %c0_i32 : i32, i32, i32
  }
  func.func @transform_2(%arg0: i32, %arg1: i32, %arg2: i32) -> (i32, i32) {
    %c0_i32 = arith.constant 0 : i32
    %c0_i32_0 = arith.constant 0 : i32
    %c0_i32_1 = arith.constant 0 : i32
    return %c0_i32, %c0_i32_0 : i32, i32
  }
  func.func @transform_3(%arg0: i32, %arg1: i32, %arg2: i32) -> (i32, i32) {
    %c0_i32 = arith.constant 0 : i32
    %c0_i32_0 = arith.constant 0 : i32
    %c0_i32_1 = arith.constant 0 : i32
    return %c0_i32, %c0_i32_0 : i32, i32
  }
  func.func @transform_4(%arg0: i32, %arg1: i32, %arg2: i32) -> (i32, i32) {
    %c0_i32 = arith.constant 0 : i32
    %c0_i32_0 = arith.constant 0 : i32
    %c0_i32_1 = arith.constant 0 : i32
    return %c0_i32, %c0_i32_0 : i32, i32
  }
  func.func @transform_5(%arg0: i32, %arg1: i32, %arg2: i32) -> (i32, i32) {
    %c0_i32 = arith.constant 0 : i32
    %c0_i32_0 = arith.constant 0 : i32
    %c0_i32_1 = arith.constant 0 : i32
    return %c0_i32, %c0_i32_0 : i32, i32
  }
  func.func @transform_6(%arg0: i32, %arg1: i32, %arg2: i32) -> (i32, i32) {
    %c0_i32 = arith.constant 0 : i32
    %c0_i32_0 = arith.constant 0 : i32
    %c0_i32_1 = arith.constant 0 : i32
    return %c0_i32, %c0_i32_0 : i32, i32
  }
  func.func @transform_7(%arg0: i32, %arg1: i32, %arg2: i32) -> (i32, i32) {
    %c0_i32 = arith.constant 0 : i32
    %c0_i32_0 = arith.constant 0 : i32
    %c0_i32_1 = arith.constant 0 : i32
    return %c0_i32, %c0_i32_0 : i32, i32
  }
  func.func @transform_8(%arg0: i32, %arg1: i32, %arg2: i32) -> (i32, i32, i32) {
    %c0_i32 = arith.constant 0 : i32
    %c0_i32_0 = arith.constant 0 : i32
    return %arg0, %arg1, %c0_i32 : i32, i32, i32
  }
}

</mosaic_0001>

<llo_original>
// kernel: tpu_custom_call.1
$region0: #{tpu_custom_call.1}
  #allocation0 [shape = 'u32[]', space=smem, size = 0x4, offset = 0x4, fixed_abs, tag = 'smem constant byte address 0x4 - core index']
  #allocation1 [shape = 'u32[144,128]{1,0:T(1,128)}', space=vmem, size = 0x12000, scoped, tag = 'internal scratch']
  #allocation2 [shape = 'f32[8,1]{1,0:T(8,128)}', space=vmem, size = 0x1000, scoped, tag = 'scratch operand']
  #allocation3 [shape = 'f32[8,1]{1,0:T(8,128)}', space=vmem, size = 0x1000, scoped, tag = 'scratch operand']
  #allocation4 [shape = 'f32[8,64]{1,0:T(8,128)}', space=vmem, size = 0x1000, scoped, tag = 'scratch operand']
  #allocation5 [shape = 'f32[8,128]{1,0:T(8,128)}', space=vmem, size = 0x1000, scoped, tag = 'scratch operand']
  #allocation6 [shape = 'f32[8,64]{1,0:T(8,128)}', space=vmem, size = 0x1000, scoped, tag = 'scratch operand']
  %s0 = inlined_call_operand.hbm [shape: f32[2,16,64], index: 0, kind: input, shape index: {}]
  %s1 = inlined_call_operand.hbm [shape: f32[2,16,64], index: 1, kind: input, shape index: {}]
  %s2 = inlined_call_operand.vmem [shape: f32[1,64], index: 2, kind: input, shape index: {}]
  %s3 = inlined_call_operand.vmem [shape: f32[1,64], index: 3, kind: input, shape index: {}]
  %s4 = inlined_call_operand.hbm [shape: bf16[64,256], index: 4, kind: input, shape index: {}]
  %s5 = inlined_call_operand.hbm [shape: bf16[64,256], index: 5, kind: input, shape index: {}]
  %s6 = inlined_call_operand.hbm [shape: bf16[64,64], index: 6, kind: input, shape index: {}]
  %s7 = inlined_call_operand.hbm [shape: bf16[64,64], index: 7, kind: input, shape index: {}]
  %s8 = inlined_call_operand.hbm [shape: f32[2,16,64], index: 8, kind: output, shape index: {}]
  %s9 = sld [smem:[#allocation0]]
  $region97: #{tpu_custom_call.1} parent=0
    _
  %s11 = ssub.s32 1, %s9
  %s12 = scalar_select 0, %s11, %s9
  $region1: #{tpu_custom_call.1} parent=0
    #allocation7 [shape = 'u8[8192]{0}', space=vmem, size = 0x2000, scoped, tag = 'input window, operand 0']
    #allocation8 [shape = 's32[2]{0}', space=sflag, size = 0x8, scoped, tag = 'scoped memory for tpu_custom_call.1']
    #allocation9 [shape = 's32[2]{0}', space=sflag, size = 0x8, scoped, tag = 'scoped memory for tpu_custom_call.1']
    #allocation10 [shape = 'u8[8192]{0}', space=vmem, size = 0x2000, scoped, tag = 'input window, operand 1']
    #allocation11 [shape = 's32[2]{0}', space=sflag, size = 0x8, scoped, tag = 'scoped memory for tpu_custom_call.1']
    #allocation12 [shape = 'u8[32768]{0}', space=vmem, size = 0x8000, scoped, tag = 'input window, operand 4, single buffered']
    #allocation13 [shape = 'u8[32768]{0}', space=vmem, size = 0x8000, scoped, tag = 'input window, operand 5, single buffered']
    #allocation14 [shape = 's32[1]{0}', space=sflag, size = 0x4, scoped, tag = 'scoped memory for tpu_custom_call.1']
    #allocation15 [shape = 'u8[16384]{0}', space=vmem, size = 0x4000, scoped, tag = 'input window, operand 6, single buffered']
    #allocation16 [shape = 'u8[16384]{0}', space=vmem, size = 0x4000, scoped, tag = 'input window, operand 7, single buffered']
    #allocation17 [shape = 's32[1]{0}', space=sflag, size = 0x4, scoped, tag = 'scoped memory for tpu_custom_call.1']
    #allocation18 [shape = 'u8[8192]{0}', space=vmem, size = 0x2000, scoped, tag = 'output window, operand 0']
    %13 = vsyncpa [#allocation8], 0
    %s14 = scalar_lea.sflag [#allocation8], 1
    %15 = vsyncpa %s14, 0
    %16 = vsyncpa [#allocation11], 0
    %s17 = scalar_lea.sflag [#allocation11], 1
    %18 = vsyncpa %s17, 0
    %19 = vsyncpa [#allocation14], 0
    %20 = vsyncpa [#allocation17], 0
    %21 = vsyncpa [#allocation9], 0
    %s22 = scalar_lea.sflag [#allocation9], 1
    %23 = vsyncpa %s22, 0
    loop: start=0, step=1, limit=10
    $region2: #{tpu_custom_call.1} parent=1 // loop_pre_header
      _
    $region3: #{tpu_custom_call.1} parent=1 // loop_header
      %s25 = sphi 0, %s29
      %p26 = scmp.ge.s32.totalorder %s25, 10
      %s32 = sphi 0, %s51
      %s33 = sphi 0, %s47
      %s34 = sphi 0, %s43
      %s35 = sphi 0, %s32
      %s36 = sphi 0, %s33
      %s37 = sphi 0, %s34
      %s38 = sphi 0, %s35
      %s39 = sphi 0, %s36
      %s40 = sphi 0, %s37
      %s56 = sphi 0, %s58
      %s59 = sphi 0, %s56
      %s60 = sphi 0, %s59
      %s76 = sphi 0, %s60
      %s84 = sphi 0, %s86
      %s87 = sphi 0, %s84
      %s88 = sphi 0, %s87
      %s104 = sphi 0, %s88
      %s108 = sphi 0, %s108
      %s110 = sphi 0, %s108
      %s111 = sphi 0, %s110
      %s125 = sphi 0, %s111
      %s129 = sphi 0, %s129
      %s131 = sphi 0, %s129
      %s132 = sphi 0, %s131
      %s146 = sphi 0, %s132
      %s150 = sphi 0, %s150
      %s152 = sphi 0, %s150
      %s153 = sphi 0, %s152
      %s167 = sphi 0, %s153
      %s171 = sphi 0, %s171
      %s173 = sphi 0, %s171
      %s174 = sphi 0, %s173
      %s188 = sphi 0, %s174
      %s192 = sphi 0, %s192
      %s194 = sphi 0, %s192
      %s195 = sphi 0, %s194
      %s209 = sphi 0, %s195
      %s213 = sphi 0, %s213
      %s215 = sphi 0, %s213
      %s216 = sphi 0, %s215
      %s230 = sphi 0, %s216
      %s238 = sphi 0, %s240
      %s241 = sphi 0, %s238
      %s242 = sphi 0, %s241
      %s258 = sphi 0, %s242
    $region4: #{tpu_custom_call.1} parent=1 // loop_header_branch
      %28 = sbr.rel (%p26) target = $region8
    $region5: #{tpu_custom_call.1} parent=1 // loop_body
      %s30 = ssub.s32 %s25, 1
      %s31 = ssub.s32 %s25, 2
      %s41 = sadd.s32 1, %s34
      %p42 = scmp.ge.s32.totalorder %s41, 2
      %s43 = scalar_select %p42, 0, %s41
      %s44 = sadd.s32 1, %s33
      %s45 = scalar_select %p42, %s44, %s33
      %p46 = scmp.ge.s32.totalorder %s45, 2
      %s47 = scalar_select %p46, 0, %s45
      %s48 = sadd.s32 1, %s32
      %s49 = scalar_select %p46, %s48, %s32
      %p50 = scmp.ge.s32.totalorder %s49, 2
      %s51 = scalar_select %p50, 0, %s49
      %s52 = ssub.s32 %s32, %s51
      %s53 = ssub.s32 %s33, %s47
      %s54 = sor.u32 %s52, %s53
      %p55 = scmp.eq.s32.totalorder %s54, 0
      %s57 = sadd.s32 %s56, 1
      %s58 = scalar_select %p55, %s56, %s57
      %p61 = pneg %p55
      %p62 = scmp.eq.s32.totalorder %s25, 7
      %p63 = por %p61, %p62
      %p64 = scmp.ne.s32.totalorder %s56, %s59
      %p65 = scmp.eq.s32.totalorder %s25, 0
      %p66 = por %p64, %p65
      %p67 = scmp.ne.s32.totalorder %s56, %s59
      %p68 = scmp.eq.s32.totalorder %s30, 7
      %p69 = por %p67, %p68
      %p70 = scmp.ne.s32.totalorder %s59, %s60
      %p71 = scmp.eq.s32.totalorder %s30, 0
      %p72 = por %p70, %p71
      %p73 = scmp.ne.s32.totalorder %s59, %s60
      %p74 = scmp.eq.s32.totalorder %s31, 7
      %p75 = por %p73, %p74
      %p77 = scmp.ne.s32.totalorder %s60, %s76
      %p78 = scmp.eq.s32.totalorder %s31, 0
      %p79 = por %p77, %p78
      %s80 = ssub.s32 %s32, %s51
      %s81 = ssub.s32 %s34, %s43
      %s82 = sor.u32 %s80, %s81
      %p83 = scmp.eq.s32.totalorder %s82, 0
      %s85 = sadd.s32 %s84, 1
      %s86 = scalar_select %p83, %s84, %s85
      %p89 = pneg %p83
      %p90 = scmp.eq.s32.totalorder %s25, 7
      %p91 = por %p89, %p90
      %p92 = scmp.ne.s32.totalorder %s84, %s87
      %p93 = scmp.eq.s32.totalorder %s25, 0
      %p94 = por %p92, %p93
      %p95 = scmp.ne.s32.totalorder %s84, %s87
      %p96 = scmp.eq.s32.totalorder %s30, 7
      %p97 = por %p95, %p96
      %p98 = scmp.ne.s32.totalorder %s87, %s88
      %p99 = scmp.eq.s32.totalorder %s30, 0
      %p100 = por %p98, %p99
      %p101 = scmp.ne.s32.totalorder %s87, %s88
      %p102 = scmp.eq.s32.totalorder %s31, 7
      %p103 = por %p101, %p102
      %p105 = scmp.ne.s32.totalorder %s88, %s104
      %p106 = scmp.eq.s32.totalorder %s31, 0
      %p107 = por %p105, %p106
      %s109 = sadd.s32 %s108, 1
      %p112 = scmp.eq.s32.totalorder %s25, 7
      %p113 = scmp.ne.s32.totalorder %s108, %s110
      %p114 = scmp.eq.s32.totalorder %s25, 0
      %p115 = por %p113, %p114
      %p116 = scmp.ne.s32.totalorder %s108, %s110
      %p117 = scmp.eq.s32.totalorder %s30, 7
      %p118 = por %p116, %p117
      %p119 = scmp.ne.s32.totalorder %s110, %s111
      %p120 = scmp.eq.s32.totalorder %s30, 0
      %p121 = por %p119, %p120
      %p122 = scmp.ne.s32.totalorder %s110, %s111
      %p123 = scmp.eq.s32.totalorder %s31, 7
      %p124 = por %p122, %p123
      %p126 = scmp.ne.s32.totalorder %s111, %s125
      %p127 = scmp.eq.s32.totalorder %s31, 0
      %p128 = por %p126, %p127
      %s130 = sadd.s32 %s129, 1
      %p133 = scmp.eq.s32.totalorder %s25, 7
      %p134 = scmp.ne.s32.totalorder %s129, %s131
      %p135 = scmp.eq.s32.totalorder %s25, 0
      %p136 = por %p134, %p135
      %p137 = scmp.ne.s32.totalorder %s129, %s131
      %p138 = scmp.eq.s32.totalorder %s30, 7
      %p139 = por %p137, %p138
      %p140 = scmp.ne.s32.totalorder %s131, %s132
      %p141 = scmp.eq.s32.totalorder %s30, 0
      %p142 = por %p140, %p141
      %p143 = scmp.ne.s32.totalorder %s131, %s132
      %p144 = scmp.eq.s32.totalorder %s31, 7
      %p145 = por %p143, %p144
      %p147 = scmp.ne.s32.totalorder %s132, %s146
      %p148 = scmp.eq.s32.totalorder %s31, 0
      %p149 = por %p147, %p148
      %s151 = sadd.s32 %s150, 1
      %p154 = scmp.eq.s32.totalorder %s25, 7
      %p155 = scmp.ne.s32.totalorder %s150, %s152
      %p156 = scmp.eq.s32.totalorder %s25, 0
      %p157 = por %p155, %p156
      %p158 = scmp.ne.s32.totalorder %s150, %s152
      %p159 = scmp.eq.s32.totalorder %s30, 7
      %p160 = por %p158, %p159
      %p161 = scmp.ne.s32.totalorder %s152, %s153
      %p162 = scmp.eq.s32.totalorder %s30, 0
      %p163 = por %p161, %p162
      %p164 = scmp.ne.s32.totalorder %s152, %s153
      %p165 = scmp.eq.s32.totalorder %s31, 7
      %p166 = por %p164, %p165
      %p168 = scmp.ne.s32.totalorder %s153, %s167
      %p169 = scmp.eq.s32.totalorder %s31, 0
      %p170 = por %p168, %p169
      %s172 = sadd.s32 %s171, 1
      %p175 = scmp.eq.s32.totalorder %s25, 7
      %p176 = scmp.ne.s32.totalorder %s171, %s173
      %p177 = scmp.eq.s32.totalorder %s25, 0
      %p178 = por %p176, %p177
      %p179 = scmp.ne.s32.totalorder %s171, %s173
      %p180 = scmp.eq.s32.totalorder %s30, 7
      %p181 = por %p179, %p180
      %p182 = scmp.ne.s32.totalorder %s173, %s174
      %p183 = scmp.eq.s32.totalorder %s30, 0
      %p184 = por %p182, %p183
      %p185 = scmp.ne.s32.totalorder %s173, %s174
      %p186 = scmp.eq.s32.totalorder %s31, 7
      %p187 = por %p185, %p186
      %p189 = scmp.ne.s32.totalorder %s174, %s188
      %p190 = scmp.eq.s32.totalorder %s31, 0
      %p191 = por %p189, %p190
      %s193 = sadd.s32 %s192, 1
      %p196 = scmp.eq.s32.totalorder %s25, 7
      %p197 = scmp.ne.s32.totalorder %s192, %s194
      %p198 = scmp.eq.s32.totalorder %s25, 0
      %p199 = por %p197, %p198
      %p200 = scmp.ne.s32.totalorder %s192, %s194
      %p201 = scmp.eq.s32.totalorder %s30, 7
      %p202 = por %p200, %p201
      %p203 = scmp.ne.s32.totalorder %s194, %s195
      %p204 = scmp.eq.s32.totalorder %s30, 0
      %p205 = por %p203, %p204
      %p206 = scmp.ne.s32.totalorder %s194, %s195
      %p207 = scmp.eq.s32.totalorder %s31, 7
      %p208 = por %p206, %p207
      %p210 = scmp.ne.s32.totalorder %s195, %s209
      %p211 = scmp.eq.s32.totalorder %s31, 0
      %p212 = por %p210, %p211
      %s214 = sadd.s32 %s213, 1
      %p217 = scmp.eq.s32.totalorder %s25, 7
      %p218 = scmp.ne.s32.totalorder %s213, %s215
      %p219 = scmp.eq.s32.totalorder %s25, 0
      %p220 = por %p218, %p219
      %p221 = scmp.ne.s32.totalorder %s213, %s215
      %p222 = scmp.eq.s32.totalorder %s30, 7
      %p223 = por %p221, %p222
      %p224 = scmp.ne.s32.totalorder %s215, %s216
      %p225 = scmp.eq.s32.totalorder %s30, 0
      %p226 = por %p224, %p225
      %p227 = scmp.ne.s32.totalorder %s215, %s216
      %p228 = scmp.eq.s32.totalorder %s31, 7
      %p229 = por %p227, %p228
      %p231 = scmp.ne.s32.totalorder %s216, %s230
      %p232 = scmp.eq.s32.totalorder %s31, 0
      %p233 = por %p231, %p232
      %s234 = ssub.s32 %s32, %s51
      %s235 = ssub.s32 %s33, %s47
      %s236 = sor.u32 %s234, %s235
      %p237 = scmp.eq.s32.totalorder %s236, 0
      %s239 = sadd.s32 %s238, 1
      %s240 = scalar_select %p237, %s238, %s239
      %p243 = pneg %p237
      %p244 = scmp.eq.s32.totalorder %s25, 7
      %p245 = por %p243, %p244
      %p246 = scmp.ne.s32.totalorder %s238, %s241
      %p247 = scmp.eq.s32.totalorder %s25, 0
      %p248 = por %p246, %p247
      %p249 = scmp.ne.s32.totalorder %s238, %s241
      %p250 = scmp.eq.s32.totalorder %s30, 7
      %p251 = por %p249, %p250
      %p252 = scmp.ne.s32.totalorder %s241, %s242
      %p253 = scmp.eq.s32.totalorder %s30, 0
      %p254 = por %p252, %p253
      %p255 = scmp.ne.s32.totalorder %s241, %s242
      %p256 = scmp.eq.s32.totalorder %s31, 7
      %p257 = por %p255, %p256
      %p259 = scmp.ne.s32.totalorder %s242, %s258
      %p260 = scmp.eq.s32.totalorder %s31, 0
      %p261 = por %p259, %p260
      %p262 = scmp.le.s32.totalorder 1, %s25
      %p263 = scmp.lt.s32.totalorder %s25, 9
      %p264 = pnand %p262, %p263
      %p265 = pneg %p264
      // Predicated region
      $region9: #{tpu_custom_call.1} parent=5 // pred_check
        _
      $region10: #{tpu_custom_call.1} parent=5 // pred_check_branch
        %267 = sbr.rel (%p264) target = $region12
      $region11: #{tpu_custom_call.1} parent=5 // pred_region
        %s268 = ssub.s32 %s25, 1
        // Predicated region
        $region13: #{tpu_custom_call.1} parent=11 // pred_check
          %p269 = pneg %p121
        $region14: #{tpu_custom_call.1} parent=11 // pred_check_branch
          %271 = sbr.rel (%p269) target = $region16
        $region15: #{tpu_custom_call.1} parent=11 // pred_region
          _
        $region16: #{tpu_custom_call.1} parent=11 // pred_fallthru
          _
        // Predicated region
        $region17: #{tpu_custom_call.1} parent=11 // pred_check
          %p272 = pneg %p142
        $region18: #{tpu_custom_call.1} parent=11 // pred_check_branch
          %274 = sbr.rel (%p272) target = $region20
        $region19: #{tpu_custom_call.1} parent=11 // pred_region
          _
        $region20: #{tpu_custom_call.1} parent=11 // pred_fallthru
          _
        // Predicated region
        $region21: #{tpu_custom_call.1} parent=11 // pred_check
          %p275 = pneg %p163
        $region22: #{tpu_custom_call.1} parent=11 // pred_check_branch
          %277 = sbr.rel (%p275) target = $region24
        $region23: #{tpu_custom_call.1} parent=11 // pred_region
          %s279 = ssub.s32 1024, 1024
          %280 = vsyncadd [#allocation11], %s279
          %s281 = sshll.u32 [#allocation12], 4
          %s282 = int_to_ptr.vmem [resolvable:$true] %s281
          %287 = dma.hbm_to_vmem [thread:$0]  %s4, 1024, %s282, [#allocation11], 128, 128, 8
        $region24: #{tpu_custom_call.1} parent=11 // pred_fallthru
          _
        // Predicated region
        $region25: #{tpu_custom_call.1} parent=11 // pred_check
          %p288 = pneg %p184
        $region26: #{tpu_custom_call.1} parent=11 // pred_check_branch
          %290 = sbr.rel (%p288) target = $region28
        $region27: #{tpu_custom_call.1} parent=11 // pred_region
          %s292 = ssub.s32 1024, 1024
          %293 = vsyncadd [#allocation14], %s292
          %s294 = sshll.u32 [#allocation13], 4
          %s295 = int_to_ptr.vmem [resolvable:$true] %s294
          %300 = dma.hbm_to_vmem [thread:$0]  %s5, 1024, %s295, [#allocation14], 128, 128, 8
        $region28: #{tpu_custom_call.1} parent=11 // pred_fallthru
          _
        // Predicated region
        $region29: #{tpu_custom_call.1} parent=11 // pred_check
          %p301 = pneg %p205
        $region30: #{tpu_custom_call.1} parent=11 // pred_check_branch
          %303 = sbr.rel (%p301) target = $region32
        $region31: #{tpu_custom_call.1} parent=11 // pred_region
          %s305 = ssub.s32 512, 512
          %306 = vsyncadd [#allocation14], %s305
          %s307 = sshll.u32 [#allocation15], 4
          %s308 = int_to_ptr.vmem [resolvable:$true] %s307
          %313 = dma.hbm_to_vmem [thread:$0]  %s6, 512, %s308, [#allocation14], 64, 64, 4
        $region32: #{tpu_custom_call.1} parent=11 // pred_fallthru
          _
        // Predicated region
        $region33: #{tpu_custom_call.1} parent=11 // pred_check
          %p314 = pneg %p226
        $region34: #{tpu_custom_call.1} parent=11 // pred_check_branch
          %316 = sbr.rel (%p314) target = $region36
        $region35: #{tpu_custom_call.1} parent=11 // pred_region
          %s318 = ssub.s32 512, 512
          %319 = vsyncadd [#allocation17], %s318
          %s320 = sshll.u32 [#allocation16], 4
          %s321 = int_to_ptr.vmem [resolvable:$true] %s320
          %326 = dma.hbm_to_vmem [thread:$0]  %s7, 512, %s321, [#allocation17], 64, 64, 4
        $region36: #{tpu_custom_call.1} parent=11 // pred_fallthru
          _
      $region12: #{tpu_custom_call.1} parent=5 // pred_fallthru
        _
      %p327 = scmp.lt.s32.totalorder %s25, 8
      // Predicated region
      $region37: #{tpu_custom_call.1} parent=5 // pred_check
        %p328 = pneg %p327
      $region38: #{tpu_custom_call.1} parent=5 // pred_check_branch
        %330 = sbr.rel (%p328) target = $region40
      $region39: #{tpu_custom_call.1} parent=5 // pred_region
        // Predicated region
        $region41: #{tpu_custom_call.1} parent=39 // pred_check
          %p331 = pneg %p66
        $region42: #{tpu_custom_call.1} parent=39 // pred_check_branch
          %333 = sbr.rel (%p331) target = $region44
        $region43: #{tpu_custom_call.1} parent=39 // pred_region
          %s334 = sand.u32 %s56, 1
          %s335 = scalar_lea.sflag [#allocation8], %s334
          %s336 = sand.u32 %s56, 1
          %s337 = smul.addr %s336, 8
          %s338 = scalar_lea.vmem [#allocation7], %s337
          %s340 = ssub.s32 128, 128
          %341 = vsyncadd %s335, %s340
          %s342 = smul.addr %s32, 2
          %s343 = sadd.s32 %s33, %s342
          %s344 = smul.addr %s343, 128
          %s345 = scalar_lea.hbm %s0, %s344
          %s347 = sshll.u32 %s338, 4
          %s348 = int_to_ptr.vmem [resolvable:$true] %s347
          %350 = dma.hbm_to_vmem [thread:$0]  %s345, 128, %s348, %s335
        $region44: #{tpu_custom_call.1} parent=39 // pred_fallthru
          _
        // Predicated region
        $region45: #{tpu_custom_call.1} parent=39 // pred_check
          %p351 = pneg %p94
        $region46: #{tpu_custom_call.1} parent=39 // pred_check_branch
          %353 = sbr.rel (%p351) target = $region48
        $region47: #{tpu_custom_call.1} parent=39 // pred_region
          %s354 = sand.u32 %s25, 1
          %s355 = scalar_lea.sflag [#allocation11], %s354
          %s356 = sand.u32 %s84, 1
          %s357 = smul.addr %s356, 8
          %s358 = scalar_lea.vmem [#allocation10], %s357
          %s360 = ssub.s32 128, 128
          %361 = vsyncadd %s355, %s360
          %s362 = smul.addr %s32, 2
          %s363 = sadd.s32 %s34, %s362
          %s364 = smul.addr %s363, 128
          %s365 = scalar_lea.hbm %s1, %s364
          %s367 = sshll.u32 %s358, 4
          %s368 = int_to_ptr.vmem [resolvable:$true] %s367
          %370 = dma.hbm_to_vmem [thread:$0]  %s365, 128, %s368, %s355
        $region48: #{tpu_custom_call.1} parent=39 // pred_fallthru
          _
      $region40: #{tpu_custom_call.1} parent=5 // pred_fallthru
        _
      %p371 = scmp.le.s32.totalorder 1, %s25
      %p372 = scmp.lt.s32.totalorder %s25, 9
      %p373 = pnand %p371, %p372
      %p374 = pneg %p373
      // Predicated region
      $region49: #{tpu_custom_call.1} parent=5 // pred_check
        _
      $region50: #{tpu_custom_call.1} parent=5 // pred_check_branch
        %376 = sbr.rel (%p373) target = $region52
      $region51: #{tpu_custom_call.1} parent=5 // pred_region
        %s377 = ssub.s32 %s25, 1
        %s378 = sand.u32 %s59, 1
        %s379 = scalar_lea.sflag [#allocation8], %s378
        %s380 = sand.u32 %s59, 1
        %s381 = smul.addr %s380, 8
        %s382 = scalar_lea.vmem [#allocation7], %s381
        // Predicated region
        $region53: #{tpu_custom_call.1} parent=51 // pred_check
          %p383 = pneg %p72
        $region54: #{tpu_custom_call.1} parent=51 // pred_check_branch
          %385 = sbr.rel (%p383) target = $region56
        $region55: #{tpu_custom_call.1} parent=51 // pred_region
          %386 = dma.done %s379, 128
        $region56: #{tpu_custom_call.1} parent=51 // pred_fallthru
          _
        %s387 = sand.u32 %s30, 1
        %s388 = scalar_lea.sflag [#allocation11], %s387
        %s389 = sand.u32 %s87, 1
        %s390 = smul.addr %s389, 8
        %s391 = scalar_lea.vmem [#allocation10], %s390
        // Predicated region
        $region57: #{tpu_custom_call.1} parent=51 // pred_check
          %p392 = pneg %p100
        $region58: #{tpu_custom_call.1} parent=51 // pred_check_branch
          %394 = sbr.rel (%p392) target = $region60
        $region59: #{tpu_custom_call.1} parent=51 // pred_region
          %395 = dma.done %s388, 128
        $region60: #{tpu_custom_call.1} parent=51 // pred_fallthru
          _
        // Predicated region
        $region61: #{tpu_custom_call.1} parent=51 // pred_check
          %p396 = pneg %p163
        $region62: #{tpu_custom_call.1} parent=51 // pred_check_branch
          %398 = sbr.rel (%p396) target = $region64
        $region63: #{tpu_custom_call.1} parent=51 // pred_region
          %399 = dma.done [#allocation11], 1024
        $region64: #{tpu_custom_call.1} parent=51 // pred_fallthru
          _
        // Predicated region
        $region65: #{tpu_custom_call.1} parent=51 // pred_check
          %p400 = pneg %p184
        $region66: #{tpu_custom_call.1} parent=51 // pred_check_branch
          %402 = sbr.rel (%p400) target = $region68
        $region67: #{tpu_custom_call.1} parent=51 // pred_region
          %403 = dma.done [#allocation14], 1024
        $region68: #{tpu_custom_call.1} parent=51 // pred_fallthru
          _
        // Predicated region
        $region69: #{tpu_custom_call.1} parent=51 // pred_check
          %p404 = pneg %p205
        $region70: #{tpu_custom_call.1} parent=51 // pred_check_branch
          %406 = sbr.rel (%p404) target = $region72
        $region71: #{tpu_custom_call.1} parent=51 // pred_region
          %407 = dma.done [#allocation14], 512
        $region72: #{tpu_custom_call.1} parent=51 // pred_fallthru
          _
        // Predicated region
        $region73: #{tpu_custom_call.1} parent=51 // pred_check
          %p408 = pneg %p226
        $region74: #{tpu_custom_call.1} parent=51 // pred_check_branch
          %410 = sbr.rel (%p408) target = $region76
        $region75: #{tpu_custom_call.1} parent=51 // pred_region
          %411 = dma.done [#allocation17], 512
        $region76: #{tpu_custom_call.1} parent=51 // pred_fallthru
          _
        %s412 = sand.u32 %s59, 1
        %s413 = scalar_lea.sflag [#allocation8], %s412
        %s414 = sand.u32 %s59, 1
        %s415 = smul.addr %s414, 8
        %s416 = scalar_lea.vmem [#allocation7], %s415
        %p417 = pneg %p72
        %p418 = pneg %p69
        %s419 = sand.u32 %s30, 1
        %s420 = scalar_lea.sflag [#allocation11], %s419
        %s421 = sand.u32 %s87, 1
        %s422 = smul.addr %s421, 8
        %s423 = scalar_lea.vmem [#allocation10], %s422
        %p424 = pneg %p100
        %p425 = pneg %p97
        %p426 = pneg %p121
        %p427 = pneg %p118
        %p428 = pneg %p142
        %p429 = pneg %p139
        %p430 = pneg %p163
        %p431 = pneg %p160
        %p432 = pneg %p184
        %p433 = pneg %p181
        %p434 = pneg %p205
        %p435 = pneg %p202
        %p436 = pneg %p226
        %p437 = pneg %p223
        %p438 = pneg %p254
        %p439 = pneg %p251
        %s440 = sand.u32 %s241, 1
        %s441 = scalar_lea.sflag [#allocation9], %s440
        %s442 = sand.u32 %s241, 1
        %s443 = smul.addr %s442, 8
        %s444 = scalar_lea.vmem [#allocation18], %s443
        %p446 = scmp.eq.s32.totalorder %s37, 0
        // Predicated region
        $region77: #{tpu_custom_call.1} parent=51 // pred_check
          %p447 = pneg %p446
        $region78: #{tpu_custom_call.1} parent=51 // pred_check_branch
          %449 = sbr.rel (%p447) target = $region80
        $region79: #{tpu_custom_call.1} parent=51 // pred_region
          %v450 = vld [vmem:[%s382] sm:$0xff]
          %vm451 = vcmask 523264
          %v452 = vsel %vm451, %v450, 0.0
          %453 = vadd.xlane.f32.xlu0 %v452
          %v454 = vpop.xlane.xlu0 %453
          %v455 = vrcp.pop 64.0
          %v456 = vmul.f32 %v454, %v455
          %v457 = vsub.f32 %v450, %v456
          %v458 = vmul.f32 %v457, %v457
          %v459 = vsel %vm451, %v458, 0.0
          %460 = vadd.xlane.f32.xlu0 %v459
          %v461 = vpop.xlane.xlu0 %460
          %v462 = vmul.f32 %v461, %v455
          %v463 = vadd.f32 %v462, 1e-05
          %v464 = vrsqrt.pop %v463
          %v465 = vmul.f32 %v457, %v464
          %v466 = vld [vmem:[%s2] sm:$0x1]
          %v468 = vlaneseq
          %v469 = vshrl.u32 %v468, 7
          %v470 = vsub.s32 0, %v469
          %v471 = vrot.slane %v466, %v470
          %v473 = vmul.f32 %v465, %v471
          %v474 = vld [vmem:[%s3] sm:$0x1]
          %v476 = vlaneseq
          %v477 = vshrl.u32 %v476, 7
          %v478 = vsub.s32 0, %v477
          %v479 = vrot.slane %v474, %v478
          %v481 = vadd.f32 %v473, %v479
          %v482 = vpack.c.bf16 %v481, %v481
          %v483 = vld [vmem:[#allocation12] sm:$0xff]
          %v484 = vld [vmem:[#allocation12 + $0x8] sm:$0xff]
          %v485 = vld [vmem:[#allocation12 + $0x10] sm:$0xff]
          %v486 = vld [vmem:[#allocation12 + $0x18] sm:$0xff]
          %v487 = vld [vmem:[#allocation12 + $0x20] sm:$0xff]
          %v488 = vld [vmem:[#allocation12 + $0x28] sm:$0xff]
          %v489 = vld [vmem:[#allocation12 + $0x30] sm:$0xff]
          %v490 = vld [vmem:[#allocation12 + $0x38] sm:$0xff]
          %v499 = vunpack.c.l.b16 %v483
          %v500 = vunpack.c.h.b16 %v483
          %v501 = vunpack.c.l.b16 %v484
          %v502 = vunpack.c.h.b16 %v484
          %v503 = vunpack.c.l.b16 %v485
          %v504 = vunpack.c.h.b16 %v485
          %v505 = vunpack.c.l.b16 %v486
          %v506 = vunpack.c.h.b16 %v486
          %v507 = vunpack.c.l.b16 %v487
          %v508 = vunpack.c.h.b16 %v487
          %v509 = vunpack.c.l.b16 %v488
          %v510 = vunpack.c.h.b16 %v488
          %v511 = vunpack.c.l.b16 %v489
          %v512 = vunpack.c.h.b16 %v489
          %v513 = vunpack.c.l.b16 %v490
          %v514 = vunpack.c.h.b16 %v490
          %v515 = vpack.c.b16 %v501, %v499
          %v516 = vpack.c.b16 %v502, %v500
          %v517 = vpack.c.b16 %v505, %v503
          %v518 = vpack.c.b16 %v506, %v504
          %v519 = vpack.c.b16 %v509, %v507
          %v520 = vpack.c.b16 %v510, %v508
          %v521 = vpack.c.b16 %v513, %v511
          %v522 = vpack.c.b16 %v514, %v512
          %v532 = vsel %vm451, %v482, 0
          %534 = vmatprep.subr.bf16.mxu0 0
          %535 = vmatpush1.bf16.msra.mxu0 0
          %536 = vmatprep.subr.bf16.mxu0 0
          %537 = vmatpush1.bf16.msra.mxu0 0
          %538 = vmatprep.subr.bf16.mxu0 0
          %539 = vmatpush1.bf16.msra.mxu0 0
          %540 = vmatprep.subr.bf16.mxu0 0
          %541 = vmatpush1.bf16.msra.mxu0 0
          %542 = vmatprep.subr.bf16.mxu0 %v522
          %543 = vmatpush1.bf16.msra.mxu0 %v521
          %544 = vmatprep.subr.bf16.mxu0 %v520
          %545 = vmatpush1.bf16.msra.mxu0 %v519
          %546 = vmatprep.subr.bf16.mxu0 %v518
          %547 = vmatpush1.bf16.msra.mxu0 %v517
          %548 = vmatprep.subr.bf16.mxu0 %v516
          %549 = vmatpush1.bf16.msra.mxu0 %v515
          %550 = vmatprep.subr.bf16.mxu0 0
          %551 = vmatpush2.bf16.msra.mxu0 0
          %552 = vmatprep.subr.bf16.mxu0 0
          %553 = vmatpush2.bf16.msra.mxu0 0
          %554 = vmatprep.subr.bf16.mxu0 0
          %555 = vmatpush2.bf16.msra.mxu0 0
          %556 = vmatprep.subr.bf16.mxu0 0
          %557 = vmatpush2.bf16.msra.mxu0 0
          %558 = vmatprep.subr.bf16.mxu0 0
          %559 = vmatpush2.bf16.msra.mxu0 0
          %560 = vmatprep.subr.bf16.mxu0 0
          %561 = vmatpush2.bf16.msra.mxu0 0
          %562 = vmatprep.subr.bf16.mxu0 0
          %563 = vmatpush2.bf16.msra.mxu0 0
          %564 = vmatprep.subr.bf16.mxu0 0
          %565 = vmatpush2.bf16.msra.mxu0 0
          %566 = vmatprep.mubr.bf16.mxu0 0
          %567 = vmatmul.mubr.bf16.gmra.mxu0 %v532
          %v568 = vpop.f32.mrf.mxu0
          %v569 = vadd.f32 0.0, %v568
          %v570 = vpop.f32.mrf.mxu0
          %v571 = vadd.f32 0.0, %v570
          %v572 = vpop.f32.mrf.mxu0
          %v573 = vpop.f32.mrf.mxu0
          %574 = vdwg.mxu0
          %v575 = vmul.f32 %v569, 0.35355338
          %576 = vst [vmem:[#allocation5] sm:$0xff] %v575
          %v577 = vmul.f32 %v571, 0.5
          %v578 = vmul.f32 %v571, 0.044715
          %v579 = vmul.f32 %v578, %v571
          %v580 = vmul.f32 %v579, %v571
          %v581 = vadd.f32 %v571, %v580
          %v582 = vmul.f32 %v581, 0.7978846
          %v583 = vtanh.pop %v582
          %v584 = vadd.f32 %v583, 1.0
          %v585 = vmul.f32 %v577, %v584
          %587 = vrot.lane.b32.xlu0 %v585, 64
          %v588 = vpop.permute.xlu0 %587
          %v590 = vmul.f32 %v571, %v588
          %591 = vst.msk [vmem:[#allocation6] sm:$0xff] %vm451, %v590
          %vm592 = vcmask 7168
          %593 = vst.msk [vmem:[#allocation2] sm:$0xff] %vm592, -inf
          %594 = vst.msk [vmem:[#allocation3] sm:$0xff] %vm592, 0.0
          %595 = vst.msk [vmem:[#allocation4] sm:$0xff] %vm451, 0.0
        $region80: #{tpu_custom_call.1} parent=51 // pred_fallthru
          _
        %v596 = vld [vmem:[%s391] sm:$0xff]
        %v597 = vpack.c.bf16 %v596, %v596
        %v598 = vld [vmem:[#allocation13] sm:$0xff]
        %v599 = vld [vmem:[#allocation13 + $0x8] sm:$0xff]
        %v600 = vld [vmem:[#allocation13 + $0x10] sm:$0xff]
        %v601 = vld [vmem:[#allocation13 + $0x18] sm:$0xff]
        %v602 = vld [vmem:[#allocation13 + $0x20] sm:$0xff]
        %v603 = vld [vmem:[#allocation13 + $0x28] sm:$0xff]
        %v604 = vld [vmem:[#allocation13 + $0x30] sm:$0xff]
        %v605 = vld [vmem:[#allocation13 + $0x38] sm:$0xff]
        %v614 = vunpack.c.l.b16 %v598
        %v615 = vunpack.c.h.b16 %v598
        %v616 = vunpack.c.l.b16 %v599
        %v617 = vunpack.c.h.b16 %v599
        %v618 = vunpack.c.l.b16 %v600
        %v619 = vunpack.c.h.b16 %v600
        %v620 = vunpack.c.l.b16 %v601
        %v621 = vunpack.c.h.b16 %v601
        %v622 = vunpack.c.l.b16 %v602
        %v623 = vunpack.c.h.b16 %v602
        %v624 = vunpack.c.l.b16 %v603
        %v625 = vunpack.c.h.b16 %v603
        %v626 = vunpack.c.l.b16 %v604
        %v627 = vunpack.c.h.b16 %v604
        %v628 = vunpack.c.l.b16 %v605
        %v629 = vunpack.c.h.b16 %v605
        %v630 = vpack.c.b16 %v616, %v614
        %v631 = vpack.c.b16 %v617, %v615
        %v632 = vpack.c.b16 %v620, %v618
        %v633 = vpack.c.b16 %v621, %v619
        %v634 = vpack.c.b16 %v624, %v622
        %v635 = vpack.c.b16 %v625, %v623
        %v636 = vpack.c.b16 %v628, %v626
        %v637 = vpack.c.b16 %v629, %v627
        %vm646 = vcmask 523264
        %v648 = vsel %vm646, %v597, 0
        %650 = vmatprep.subr.bf16.mxu0 0
        %651 = vmatpush1.bf16.msra.mxu0 0
        %652 = vmatprep.subr.bf16.mxu0 0
        %653 = vmatpush1.bf16.msra.mxu0 0
        %654 = vmatprep.subr.bf16.mxu0 0
        %655 = vmatpush1.bf16.msra.mxu0 0
        %656 = vmatprep.subr.bf16.mxu0 0
        %657 = vmatpush1.bf16.msra.mxu0 0
        %658 = vmatprep.subr.bf16.mxu0 %v637
        %659 = vmatpush1.bf16.msra.mxu0 %v636
        %660 = vmatprep.subr.bf16.mxu0 %v635
        %661 = vmatpush1.bf16.msra.mxu0 %v634
        %662 = vmatprep.subr.bf16.mxu0 %v633
        %663 = vmatpush1.bf16.msra.mxu0 %v632
        %664 = vmatprep.subr.bf16.mxu0 %v631
        %665 = vmatpush1.bf16.msra.mxu0 %v630
        %666 = vmatprep.subr.bf16.mxu0 0
        %667 = vmatpush2.bf16.msra.mxu0 0
        %668 = vmatprep.subr.bf16.mxu0 0
        %669 = vmatpush2.bf16.msra.mxu0 0
        %670 = vmatprep.subr.bf16.mxu0 0
        %671 = vmatpush2.bf16.msra.mxu0 0
        %672 = vmatprep.subr.bf16.mxu0 0
        %673 = vmatpush2.bf16.msra.mxu0 0
        %674 = vmatprep.subr.bf16.mxu0 0
        %675 = vmatpush2.bf16.msra.mxu0 0
        %676 = vmatprep.subr.bf16.mxu0 0
        %677 = vmatpush2.bf16.msra.mxu0 0
        %678 = vmatprep.subr.bf16.mxu0 0
        %679 = vmatpush2.bf16.msra.mxu0 0
        %680 = vmatprep.subr.bf16.mxu0 0
        %681 = vmatpush2.bf16.msra.mxu0 0
        %682 = vmatprep.mubr.bf16.mxu0 0
        %683 = vmatmul.mubr.bf16.gmra.mxu0 %v648
        %v684 = vpop.f32.mrf.mxu0
        %v685 = vadd.f32 0.0, %v684
        %v686 = vpop.f32.mrf.mxu0
        %v687 = vadd.f32 0.0, %v686
        %v688 = vpop.f32.mrf.mxu0
        %v689 = vpop.f32.mrf.mxu0
        %690 = vdwg.mxu0
        %v691 = vmul.f32 %v687, 0.5
        %v692 = vmul.f32 %v687, 0.044715
        %v693 = vmul.f32 %v692, %v687
        %v694 = vmul.f32 %v693, %v687
        %v695 = vadd.f32 %v687, %v694
        %v696 = vmul.f32 %v695, 0.7978846
        %v697 = vtanh.pop %v696
        %v698 = vadd.f32 %v697, 1.0
        %v699 = vmul.f32 %v691, %v698
        %701 = vrot.lane.b32.xlu0 %v699, 64
        %v702 = vpop.permute.xlu0 %701
        %v704 = vmul.f32 %v687, %v702
        %v705 = vld [vmem:[#allocation5] sm:$0xff]
        %v706 = vpack.c.bf16 %v705, %v705
        %v707 = vpack.c.bf16 %v685, %v685
        %708 = vmatprep.subr.bf16.mxu0 0
        %709 = vmatpush1.bf16.xpose.msra.mxu0 0
        %710 = vmatprep.subr.bf16.mxu0 0
        %711 = vmatpush1.bf16.xpose.msra.mxu0 0
        %712 = vmatprep.subr.bf16.mxu0 0
        %713 = vmatpush1.bf16.xpose.msra.mxu0 0
        %714 = vmatprep.subr.bf16.mxu0 0
        %715 = vmatpush1.bf16.xpose.msra.mxu0 0
        %716 = vmatprep.subr.bf16.mxu0 0
        %717 = vmatpush1.bf16.xpose.msra.mxu0 0
        %718 = vmatprep.subr.bf16.mxu0 0
        %719 = vmatpush1.bf16.xpose.msra.mxu0 0
        %720 = vmatprep.subr.bf16.mxu0 0
        %721 = vmatpush1.bf16.xpose.msra.mxu0 0
        %722 = vmatprep.subr.bf16.mxu0 0
        %723 = vmatpush1.bf16.xpose.msra.mxu0 %v707
        %724 = vmatprep.subr.bf16.mxu0 0
        %725 = vmatpush2.bf16.xpose.msra.mxu0 0
        %726 = vmatprep.subr.bf16.mxu0 0
        %727 = vmatpush2.bf16.xpose.msra.mxu0 0
        %728 = vmatprep.subr.bf16.mxu0 0
        %729 = vmatpush2.bf16.xpose.msra.mxu0 0
        %730 = vmatprep.subr.bf16.mxu0 0
        %731 = vmatpush2.bf16.xpose.msra.mxu0 0
        %732 = vmatprep.subr.bf16.mxu0 0
        %733 = vmatpush2.bf16.xpose.msra.mxu0 0
        %734 = vmatprep.subr.bf16.mxu0 0
        %735 = vmatpush2.bf16.xpose.msra.mxu0 0
        %736 = vmatprep.subr.bf16.mxu0 0
        %737 = vmatpush2.bf16.xpose.msra.mxu0 0
        %738 = vmatprep.subr.bf16.mxu0 0
        %739 = vmatpush2.bf16.xpose.msra.mxu0 0
        %740 = vmatprep.mubr.bf16.mxu0 0
        %741 = vmatmul.mubr.bf16.gmra.mxu0 %v706
        %v742 = vpop.f32.mrf.mxu0
        %v743 = vadd.f32 0.0, %v742
        %v744 = vpop.f32.mrf.mxu0
        %v745 = vpop.f32.mrf.mxu0
        %v746 = vpop.f32.mrf.mxu0
        %747 = vdwg.mxu0
        %v748 = vld [vmem:[#allocation2] sm:$0xff]
        %vm749 = vcmask 64512
        %v750 = vsel %vm749, %v743, -inf
        %751 = vmax.xlane.f32.xlu0 %v750
        %v752 = vpop.xlane.xlu0 %751
        %v753 = vmax.f32 %v748, %v752
        %v754 = vsub.f32 %v748, %v753
        %v755 = vmul.f32 %v754, 1.442695
        %v756 = vpow.pop %v755
        %758 = vset.pattern.permute.xlu0 0
        %759 = vperm.xlu0 %758, %v753
        %v760 = vpop.permute.xlu0 %759
        %v762 = vsub.f32 %v743, %v760
        %v763 = vmul.f32 %v762, 1.442695
        %v764 = vpow.pop %v763
        %v765 = vld [vmem:[#allocation3] sm:$0xff]
        %v766 = vmul.f32 %v756, %v765
        %v767 = vsel %vm749, %v764, 0.0
        %768 = vadd.xlane.f32.xlu0 %v767
        %v769 = vpop.xlane.xlu0 %768
        %v770 = vadd.f32 %v766, %v769
        %vm771 = vcmask 7168
        %772 = vst.msk [vmem:[#allocation3] sm:$0xff] %vm771, %v770
        %v773 = vld [vmem:[#allocation4] sm:$0xff]
        %775 = vset.pattern.permute.xlu0 0
        %776 = vperm.xlu0 %775, %v756
        %v777 = vpop.permute.xlu0 %776
        %v779 = vmul.f32 %v777, %v773
        %v780 = vpack.c.bf16 %v764, %v764
        %v781 = vpack.c.bf16 %v704, %v704
        %v783 = vsel %vm749, %v780, 0
        %vm785 = vcmask 1043456
        %v787 = vsel %vm785, %v781, 0
        %789 = vmatprep.subr.bf16.mxu0 0
        %790 = vmatpush1.bf16.msra.mxu0 0
        %791 = vmatprep.subr.bf16.mxu0 0
        %792 = vmatpush1.bf16.msra.mxu0 0
        %793 = vmatprep.subr.bf16.mxu0 0
        %794 = vmatpush1.bf16.msra.mxu0 0
        %795 = vmatprep.subr.bf16.mxu0 0
        %796 = vmatpush1.bf16.msra.mxu0 0
        %797 = vmatprep.subr.bf16.mxu0 0
        %798 = vmatpush1.bf16.msra.mxu0 0
        %799 = vmatprep.subr.bf16.mxu0 0
        %800 = vmatpush1.bf16.msra.mxu0 0
        %801 = vmatprep.subr.bf16.mxu0 0
        %802 = vmatpush1.bf16.msra.mxu0 0
        %803 = vmatprep.subr.bf16.mxu0 0
        %804 = vmatpush1.bf16.msra.mxu0 %v787
        %805 = vmatprep.subr.bf16.mxu0 0
        %806 = vmatpush2.bf16.msra.mxu0 0
        %807 = vmatprep.subr.bf16.mxu0 0
        %808 = vmatpush2.bf16.msra.mxu0 0
        %809 = vmatprep.subr.bf16.mxu0 0
        %810 = vmatpush2.bf16.msra.mxu0 0
        %811 = vmatprep.subr.bf16.mxu0 0
        %812 = vmatpush2.bf16.msra.mxu0 0
        %813 = vmatprep.subr.bf16.mxu0 0
        %814 = vmatpush2.bf16.msra.mxu0 0
        %815 = vmatprep.subr.bf16.mxu0 0
        %816 = vmatpush2.bf16.msra.mxu0 0
        %817 = vmatprep.subr.bf16.mxu0 0
        %818 = vmatpush2.bf16.msra.mxu0 0
        %819 = vmatprep.subr.bf16.mxu0 0
        %820 = vmatpush2.bf16.msra.mxu0 0
        %821 = vmatprep.mubr.bf16.mxu0 0
        %822 = vmatmul.mubr.bf16.gmra.mxu0 %v783
        %v823 = vpop.f32.mrf.mxu0
        %v824 = vadd.f32 0.0, %v823
        %v825 = vpop.f32.mrf.mxu0
        %v826 = vpop.f32.mrf.mxu0
        %v827 = vpop.f32.mrf.mxu0
        %828 = vdwg.mxu0
        %v829 = vadd.f32 %v779, %v824
        %830 = vst.msk [vmem:[#allocation4] sm:$0xff] %vm646, %v829
        %831 = vst.msk [vmem:[#allocation2] sm:$0xff] %vm771, %v753
        %p832 = scmp.eq.s32.totalorder %s37, 1
        // Predicated region
        $region81: #{tpu_custom_call.1} parent=51 // pred_check
          %p833 = pneg %p832
        $region82: #{tpu_custom_call.1} parent=51 // pred_check_branch
          %835 = sbr.rel (%p833) target = $region84
        $region83: #{tpu_custom_call.1} parent=51 // pred_region
          %v836 = vld [vmem:[#allocation4] sm:$0xff]
          %v837 = vld [vmem:[#allocation3] sm:$0xff]
          %v838 = vrcp.pop %v837
          %840 = vset.pattern.permute.xlu0 0
          %841 = vperm.xlu0 %840, %v838
          %v842 = vpop.permute.xlu0 %841
          %v844 = vmul.f32 %v836, %v842
          %v845 = vld [vmem:[#allocation6] sm:$0xff]
          %v846 = vpack.c.bf16 %v845, %v845
          %v847 = vld [vmem:[#allocation15] sm:$0xf]
          %v848 = vld [vmem:[#allocation15 + $0x4] sm:$0xf]
          %v849 = vld [vmem:[#allocation15 + $0x8] sm:$0xf]
          %v850 = vld [vmem:[#allocation15 + $0xc] sm:$0xf]
          %v851 = vld [vmem:[#allocation15 + $0x10] sm:$0xf]
          %v852 = vld [vmem:[#allocation15 + $0x14] sm:$0xf]
          %v853 = vld [vmem:[#allocation15 + $0x18] sm:$0xf]
          %v854 = vld [vmem:[#allocation15 + $0x1c] sm:$0xf]
          %v855 = vpack.c.bf16 %v844, %v844
          %v856 = vld [vmem:[#allocation16] sm:$0xf]
          %v857 = vld [vmem:[#allocation16 + $0x4] sm:$0xf]
          %v858 = vld [vmem:[#allocation16 + $0x8] sm:$0xf]
          %v859 = vld [vmem:[#allocation16 + $0xc] sm:$0xf]
          %v860 = vld [vmem:[#allocation16 + $0x10] sm:$0xf]
          %v861 = vld [vmem:[#allocation16 + $0x14] sm:$0xf]
          %v862 = vld [vmem:[#allocation16 + $0x18] sm:$0xf]
          %v863 = vld [vmem:[#allocation16 + $0x1c] sm:$0xf]
          %v872 = vunpack.c.l.b16 %v856
          %v873 = vunpack.c.l.b16 %v857
          %v874 = vunpack.c.l.b16 %v858
          %v875 = vunpack.c.l.b16 %v859
          %v876 = vunpack.c.l.b16 %v860
          %v877 = vunpack.c.l.b16 %v861
          %v878 = vunpack.c.l.b16 %v862
          %v879 = vunpack.c.l.b16 %v863
          %v880 = vpack.c.b16 %v873, %v872
          %v881 = vpack.c.b16 %v875, %v874
          %v882 = vpack.c.b16 %v877, %v876
          %v883 = vpack.c.b16 %v879, %v878
          %v889 = vsel %vm646, %v855, 0
          %891 = vmatprep.subr.bf16.mxu0 0
          %892 = vmatpush1.bf16.msra.mxu0 0
          %893 = vmatprep.subr.bf16.mxu0 0
          %894 = vmatpush1.bf16.msra.mxu0 0
          %895 = vmatprep.subr.bf16.mxu0 0
          %896 = vmatpush1.bf16.msra.mxu0 0
          %897 = vmatprep.subr.bf16.mxu0 0
          %898 = vmatpush1.bf16.msra.mxu0 0
          %899 = vmatprep.subr.bf16.mxu0 0
          %900 = vmatpush1.bf16.msra.mxu0 %v883
          %901 = vmatprep.subr.bf16.mxu0 0
          %902 = vmatpush1.bf16.msra.mxu0 %v882
          %903 = vmatprep.subr.bf16.mxu0 0
          %904 = vmatpush1.bf16.msra.mxu0 %v881
          %905 = vmatprep.subr.bf16.mxu0 0
          %906 = vmatpush1.bf16.msra.mxu0 %v880
          %907 = vmatprep.subr.bf16.mxu0 0
          %908 = vmatpush2.bf16.msra.mxu0 0
          %909 = vmatprep.subr.bf16.mxu0 0
          %910 = vmatpush2.bf16.msra.mxu0 0
          %911 = vmatprep.subr.bf16.mxu0 0
          %912 = vmatpush2.bf16.msra.mxu0 0
          %913 = vmatprep.subr.bf16.mxu0 0
          %914 = vmatpush2.bf16.msra.mxu0 0
          %915 = vmatprep.subr.bf16.mxu0 0
          %916 = vmatpush2.bf16.msra.mxu0 0
          %917 = vmatprep.subr.bf16.mxu0 0
          %918 = vmatpush2.bf16.msra.mxu0 0
          %919 = vmatprep.subr.bf16.mxu0 0
          %920 = vmatpush2.bf16.msra.mxu0 0
          %921 = vmatprep.subr.bf16.mxu0 0
          %922 = vmatpush2.bf16.msra.mxu0 0
          %923 = vmatprep.mubr.bf16.mxu0 0
          %924 = vmatmul.mubr.bf16.gmra.mxu0 %v889
          %v925 = vpop.f32.mrf.mxu0
          %v926 = vadd.f32 0.0, %v925
          %v927 = vpop.f32.mrf.mxu0
          %v928 = vpop.f32.mrf.mxu0
          %v929 = vpop.f32.mrf.mxu0
          %930 = vdwg.mxu0
          %v939 = vunpack.c.l.b16 %v847
          %v940 = vunpack.c.l.b16 %v848
          %v941 = vunpack.c.l.b16 %v849
          %v942 = vunpack.c.l.b16 %v850
          %v943 = vunpack.c.l.b16 %v851
          %v944 = vunpack.c.l.b16 %v852
          %v945 = vunpack.c.l.b16 %v853
          %v946 = vunpack.c.l.b16 %v854
          %v947 = vpack.c.b16 %v940, %v939
          %v948 = vpack.c.b16 %v942, %v941
          %v949 = vpack.c.b16 %v944, %v943
          %v950 = vpack.c.b16 %v946, %v945
          %v956 = vsel %vm646, %v846, 0
          %958 = vmatprep.subr.bf16.mxu0 0
          %959 = vmatpush1.bf16.msra.mxu0 0
          %960 = vmatprep.subr.bf16.mxu0 0
          %961 = vmatpush1.bf16.msra.mxu0 0
          %962 = vmatprep.subr.bf16.mxu0 0
          %963 = vmatpush1.bf16.msra.mxu0 0
          %964 = vmatprep.subr.bf16.mxu0 0
          %965 = vmatpush1.bf16.msra.mxu0 0
          %966 = vmatprep.subr.bf16.mxu0 0
          %967 = vmatpush1.bf16.msra.mxu0 %v950
          %968 = vmatprep.subr.bf16.mxu0 0
          %969 = vmatpush1.bf16.msra.mxu0 %v949
          %970 = vmatprep.subr.bf16.mxu0 0
          %971 = vmatpush1.bf16.msra.mxu0 %v948
          %972 = vmatprep.subr.bf16.mxu0 0
          %973 = vmatpush1.bf16.msra.mxu0 %v947
          %974 = vmatprep.subr.bf16.mxu0 0
          %975 = vmatpush2.bf16.msra.mxu0 0
          %976 = vmatprep.subr.bf16.mxu0 0
          %977 = vmatpush2.bf16.msra.mxu0 0
          %978 = vmatprep.subr.bf16.mxu0 0
          %979 = vmatpush2.bf16.msra.mxu0 0
          %980 = vmatprep.subr.bf16.mxu0 0
          %981 = vmatpush2.bf16.msra.mxu0 0
          %982 = vmatprep.subr.bf16.mxu0 0
          %983 = vmatpush2.bf16.msra.mxu0 0
          %984 = vmatprep.subr.bf16.mxu0 0
          %985 = vmatpush2.bf16.msra.mxu0 0
          %986 = vmatprep.subr.bf16.mxu0 0
          %987 = vmatpush2.bf16.msra.mxu0 0
          %988 = vmatprep.subr.bf16.mxu0 0
          %989 = vmatpush2.bf16.msra.mxu0 0
          %990 = vmatprep.mubr.bf16.mxu0 0
          %991 = vmatmul.mubr.bf16.gmra.mxu0 %v956
          %v992 = vpop.f32.mrf.mxu0
          %v993 = vadd.f32 %v926, %v992
          %v994 = vpop.f32.mrf.mxu0
          %v995 = vpop.f32.mrf.mxu0
          %v996 = vpop.f32.mrf.mxu0
          %997 = vdwg.mxu0
          %v998 = vld [vmem:[%s382] sm:$0xff]
          %v999 = vadd.f32 %v998, %v993
          %1000 = vst.msk [vmem:[%s444] sm:$0xff] %vm646, %v999
        $region84: #{tpu_custom_call.1} parent=51 // pred_fallthru
          _
        %s1001 = sand.u32 %s241, 1
        %s1002 = scalar_lea.sflag [#allocation9], %s1001
        %s1003 = sand.u32 %s241, 1
        %s1004 = smul.addr %s1003, 8
        %s1005 = scalar_lea.vmem [#allocation18], %s1004
        // Predicated region
        $region85: #{tpu_custom_call.1} parent=51 // pred_check
          %p1006 = pneg %p251
        $region86: #{tpu_custom_call.1} parent=51 // pred_check_branch
          %1008 = sbr.rel (%p1006) target = $region88
        $region87: #{tpu_custom_call.1} parent=51 // pred_region
          %s1010 = ssub.s32 128, 128
          %1011 = vsyncadd %s1002, %s1010
          %s1012 = smul.addr %s35, 2
          %s1013 = sadd.s32 %s36, %s1012
          %s1014 = smul.addr %s1013, 128
          %s1015 = scalar_lea.hbm %s8, %s1014
          %s1017 = sshll.u32 %s1005, 4
          %s1018 = int_to_ptr.vmem [resolvable:$true] %s1017
          %1020 = dma.vmem_to_hbm [thread:$0]  %s1018, 128, %s1015, %s1002
        $region88: #{tpu_custom_call.1} parent=51 // pred_fallthru
          _
      $region52: #{tpu_custom_call.1} parent=5 // pred_fallthru
        _
      %p1021 = scmp.le.s32.totalorder 2, %s25
      // Predicated region
      $region89: #{tpu_custom_call.1} parent=5 // pred_check
        %p1022 = pneg %p1021
      $region90: #{tpu_custom_call.1} parent=5 // pred_check_branch
        %1024 = sbr.rel (%p1022) target = $region92
      $region91: #{tpu_custom_call.1} parent=5 // pred_region
        %s1025 = ssub.s32 %s25, 2
        // Predicated region
        $region93: #{tpu_custom_call.1} parent=91 // pred_check
          %p1026 = pneg %p257
        $region94: #{tpu_custom_call.1} parent=91 // pred_check_branch
          %1028 = sbr.rel (%p1026) target = $region96
        $region95: #{tpu_custom_call.1} parent=91 // pred_region
          %s1029 = sand.u32 %s242, 1
          %s1030 = scalar_lea.sflag [#allocation9], %s1029
          %s1031 = sand.u32 %s242, 1
          %s1032 = smul.addr %s1031, 8
          %s1033 = scalar_lea.vmem [#allocation18], %s1032
          %1034 = dma.done %s1030, 128
        $region96: #{tpu_custom_call.1} parent=91 // pred_fallthru
          _
      $region92: #{tpu_custom_call.1} parent=5 // pred_fallthru
        _
    $region6: #{tpu_custom_call.1} parent=1 // loop_footer
      %s29 = sadd.s32 1, %s25
    $region7: #{tpu_custom_call.1} parent=1 // loop_footer_branch
      %24 = sbr.rel target = $region3
    $region8: #{tpu_custom_call.1} parent=1 // loop_exit
      _
    %1035 = vsyncpa [#allocation8], 1
    %s1036 = scalar_lea.sflag [#allocation8], 1
    %1037 = vsyncpa %s1036, 1
    %1038 = vsyncpa [#allocation11], 1
    %s1039 = scalar_lea.sflag [#allocation11], 1
    %1040 = vsyncpa %s1039, 1
    %1041 = vsyncpa [#allocation14], 1
    %1042 = vsyncpa [#allocation17], 1
    %1043 = vsyncpa [#allocation9], 1
    %s1044 = scalar_lea.sflag [#allocation9], 1
    %1045 = vsyncpa %s1044, 1

</llo_original>
